<compile_context>
chip_gen: v6e
topology: v6e:2x2x1
jax: 0.10.0
libtpu: 0.0.40
codegen_flags: <defaults>
</compile_context>

<pallas_src>
import math

import jax
import jax.numpy as jnp
from jax import lax
from jax.experimental import pallas as pl
from jax.experimental.pallas import tpu as pltpu


# ----------------------------------------------------------------------------
# Nearest-neighbor 3-D interpolation (F.interpolate(mode='nearest'))
# ----------------------------------------------------------------------------
def _nearest_kernel(x_ref, sel_ref, o_ref):
    # x_ref: (TILE_M, Hi*Wi), sel_ref: (Hi*Wi, Ho*Wo), o_ref: (TILE_M, Ho*Wo)
    o_ref[...] = jnp.dot(x_ref[...], sel_ref[...],
                         preferred_element_type=jnp.float32).astype(o_ref.dtype)


def nearest_interp3d_pallas(x, size):
    """x: (N, C, Di, Hi, Wi) -> (N, C, Do, Ho, Wo) with PyTorch 'nearest'."""
    N, C, Di, Hi, Wi = x.shape
    Do, Ho, Wo = (int(s) for s in size)

    # Depth is a pure gather (identity when Do == Di, the default (1,2,2) case).
    if Do != Di:
        di = (jnp.arange(Do) * Di) // Do
        x = jnp.take(x, di, axis=2)

    # Fused H/W selection matrix: exactly one 1.0 per column -> exact in any
    # float dtype (bf16 inputs stay exact; dtype is preserved end to end).
    def sel(in_size, out_size):
        idx = (jnp.arange(out_size) * in_size) // out_size   # floor(dst*in/out)
        return (idx[None, :] == jnp.arange(in_size)[:, None]).astype(x.dtype)

    S = jnp.kron(sel(Hi, Ho), sel(Wi, Wo))                   # (Hi*Wi, Ho*Wo)
    # TODO(synk): for very large planes (S or a row tile exceeding the VMEM
    # budget) fall back to a separable Sh/Sw selection with H/W tiling.

    rows = N * C * Do
    x2 = x.reshape(rows, Hi * Wi)

    rows_p = ((rows + 7) // 8) * 8
    if rows_p != rows:
        x2 = jnp.pad(x2, ((0, rows_p - rows), (0, 0)))

    # Prefer MXU-sized row tiles (256/512) but stay well inside the VMEM budget
    # (input + output tile, double-buffered).
    bytes_per_row = (Hi * Wi + Ho * Wo) * x.dtype.itemsize
    tile_m = 8
    for t in (512, 256, 128, 64, 32, 16, 8):
        if rows_p % t == 0 and 2 * t * bytes_per_row <= 24 * 1024 * 1024:
            tile_m = t
            break

    out = pl.pallas_call(
        _nearest_kernel,
        out_shape=jax.ShapeDtypeStruct((rows_p, Ho * Wo), x.dtype),
        grid=(rows_p // tile_m,),
        in_specs=[
            pl.BlockSpec((tile_m, Hi * Wi), lambda i: (i, 0)),
            pl.BlockSpec((Hi * Wi, Ho * Wo), lambda i: (0, 0)),
        ],
        out_specs=pl.BlockSpec((tile_m, Ho * Wo), lambda i: (i, 0)),
        compiler_params=pltpu.CompilerParams(
            dimension_semantics=("parallel",),
            vmem_limit_bytes=32 * 1024 * 1024),
    )(x2, S)

    return out[:rows].reshape(N, C, Do, Ho, Wo)


# ----------------------------------------------------------------------------
# ConvTranspose3d(kernel=K, stride=scale_factor, padding=1, output_size=...)
# via subpixel / phase decomposition (no zero-stuffed volume anywhere)
# ----------------------------------------------------------------------------
def _convt_phase(xcl, weight, bias_p, pd, ph, pw, Co, Co_pad):
    """One output phase: stride-1 valid correlation, lane-dense channels."""
    N, Di, Hi, Wi, Ci = xcl.shape
    AD, AH, AW = pd['A'], ph['A'], pw['A']
    TD, TH, TW = pd['T'], ph['T'], pw['T']
    LD, LH, LW = pd['L'], ph['L'], pw['L']

    # Zero-halo window of the (small, pre-upsample) input read by this phase.
    # Only <= K-1 of padding per side is ever materialized -- never a
    # stride-product-sized zero-stuffed volume.
    pads, starts = [(0, 0)], []
    for info, I in zip((pd, ph, pw), (Di, Hi, Wi)):
        p_lo = max(0, -info['lo'])
        p_hi = max(0, info['lo'] + info['L'] - I)
        pads.append((p_lo, p_hi))
        starts.append(info['lo'] + p_lo)
    pads.append((0, 0))
    xp = jnp.pad(xcl, pads)
    xp = xp[:, starts[0]:starts[0] + LD, starts[1]:starts[1] + LH,
            starts[2]:starts[2] + LW, :]                     # (N, LD, LH, LW, Ci)

    # Phase sub-kernel: one (Ci, Co_pad) matrix per tap, spatially flipped order.
    wmats = []
    for jjd in range(TD):
        for jjh in range(TH):
            for jjw in range(TW):
                wmats.append(weight[:, :, pd['taps'][jjd], ph['taps'][jjh],
                                    pw['taps'][jjw]])        # (Ci, Co)
    w = jnp.stack(wmats, axis=0)                             # (T3, Ci, Co)
    w = jnp.pad(w, ((0, 0), (0, 0), (0, Co_pad - Co)))
    T3 = TD * TH * TW
    M = AH * AW

    def kernel(*refs):
        x_refs = refs[:TD]
        w_ref, b_ref, o_ref, acc_ref = refs[TD:]
        # f32 VMEM scratch accumulator (bias-initialised) bounds live ranges
        # across the per-tap matmul chain.
        acc_ref[...] = jnp.broadcast_to(b_ref[...], (M, Co_pad))
        for jjd in range(TD):
            x = x_refs[jjd][0, 0]                            # (LH, LW, Ci)
            for jjh in range(TH):
                for jjw in range(TW):
                    t = (jjd * TH + jjh) * TW + jjw
                    patch = x[jjh:jjh + AH, jjw:jjw + AW, :].reshape(M, Ci)
                    acc_ref[...] += jnp.dot(patch, w_ref[t],
                                            preferred_element_type=jnp.float32)
        o_ref[0, 0] = acc_ref[...].reshape(AH, AW, Co_pad).astype(o_ref.dtype)

    # The same xp is passed TD times with depth-shifted index_maps so each grid
    # step sees its TD depth slices without overlapping-block machinery.
    # TODO(synk): fold the W taps into the contraction ((TW*Ci, Co_pad) weights)
    # to further raise MXU K utilisation when Ci is small.
    x_specs = [
        pl.BlockSpec((1, 1, LH, LW, Ci),
                     lambda n, a, _jjd=jjd: (n, a + _jjd, 0, 0, 0))
        for jjd in range(TD)
    ]
    yp = pl.pallas_call(
        kernel,
        out_shape=jax.ShapeDtypeStruct((N, AD, AH, AW, Co_pad), xcl.dtype),
        grid=(N, AD),
        in_specs=x_specs + [
            pl.BlockSpec((T3, Ci, Co_pad), lambda n, a: (0, 0, 0)),
            pl.BlockSpec((1, Co_pad), lambda n, a: (0, 0)),
        ],
        out_specs=pl.BlockSpec((1, 1, AH, AW, Co_pad),
                               lambda n, a: (n, a, 0, 0, 0)),
        scratch_shapes=[pltpu.VMEM((M, Co_pad), jnp.float32)],
        compiler_params=pltpu.CompilerParams(
            dimension_semantics=("parallel", "parallel"),
            vmem_limit_bytes=32 * 1024 * 1024),
    )(*([xp] * TD), w, bias_p)

    return yp[..., :Co]


def convtranspose3d_pallas(x, weight, bias, out_size, stride, padding, K):
    """x: (N, Ci, Di, Hi, Wi), weight: (Ci, Co, K, K, K) -> (N, Co, Do, Ho, Wo)."""
    N, Ci, Di, Hi, Wi = x.shape
    Do, Ho, Wo = (int(s) for s in out_size)
    Co = weight.shape[1]
    sD, sH, sW = stride
    in_sz = (Di, Hi, Wi)

    # output_padding implied by the requested output_size (PyTorch semantics).
    for o, i, s in zip((Do, Ho, Wo), in_sz, stride):
        op = o - ((i - 1) * s - 2 * padding + K)
        assert 0 <= op < max(s, 1), "requested output_size not reachable"

    # Lane-dense output channels for the kernel (stripped again afterwards).
    Co_pad = ((Co + 127) // 128) * 128

    xcl = jnp.transpose(x, (0, 2, 3, 4, 1))                  # (N, Di, Hi, Wi, Ci)
    bias_p = jnp.zeros((1, Co_pad), jnp.float32).at[0, :Co].set(
        bias.astype(jnp.float32))

    def dim_phases(I, O, s):
        """Per-phase metadata for one spatial dim of the transposed conv."""
        phases = []
        for r in range(s):
            T = max(0, (K - 1 - r) // s + 1)                 # taps with k%s == r
            o0 = (r - padding) % s                           # first output index
            if o0 >= O:
                phases.append(None)
                continue
            A = (O - 1 - o0) // s + 1                        # outputs in phase
            Q0 = (o0 + padding) // s
            lo = Q0 - (T - 1)                                # lowest input id
            L = A + T - 1                                    # input window length
            taps = [r + (T - 1 - jj) * s for jj in range(T)]  # flipped tap order
            phases.append(dict(o0=o0, A=A, T=T, lo=lo, L=L, taps=taps))
        return phases

    ph_d = dim_phases(Di, Do, sD)
    ph_h = dim_phases(Hi, Ho, sH)
    ph_w = dim_phases(Wi, Wo, sW)

    y_cl = jnp.zeros((N, Do, Ho, Wo, Co), x.dtype)
    for pd in ph_d:
        if pd is None:
            continue
        for ph in ph_h:
            if ph is None:
                continue
            for pw in ph_w:
                if pw is None:
                    continue
                idx = (slice(None), slice(pd['o0'], None, sD),
                       slice(ph['o0'], None, sH), slice(pw['o0'], None, sW),
                       slice(None))
                if min(pd['T'], ph['T'], pw['T']) == 0:
                    # phase touched by no kernel tap (only if stride > K)
                    y_cl = y_cl.at[idx].set(jnp.broadcast_to(
                        bias.astype(x.dtype),
                        (N, pd['A'], ph['A'], pw['A'], Co)))
                    continue
                yp = _convt_phase(xcl, weight, bias_p, pd, ph, pw, Co, Co_pad)
                y_cl = y_cl.at[idx].set(yp)

    return jnp.transpose(y_cl, (0, 4, 1, 2, 3))              # back to NCDHW


# ----------------------------------------------------------------------------
# Module wrapper mirroring hyperseg Upsampling
# ----------------------------------------------------------------------------
class Upsampling:
    def __init__(self, transposed_conv, in_channels=None, out_channels=None,
                 kernel_size=3, scale_factor=(1, 2, 2), mode='nearest',
                 key=None):
        self.transposed_conv = transposed_conv
        if transposed_conv:
            K = int(kernel_size)
            stride = (tuple(scale_factor)
                      if isinstance(scale_factor, (tuple, list))
                      else (scale_factor,) * 3)
            key = jax.random.PRNGKey(0) if key is None else key
            kw, kb = jax.random.split(key)
            fan = out_channels * K * K * K
            bound = 1.0 / math.sqrt(fan)
            self.weight = jax.random.uniform(
                kw, (in_channels, out_channels, K, K, K), jnp.float32,
                -bound, bound)
            self.bias = jax.random.uniform(kb, (out_channels,), jnp.float32,
                                           -bound, bound)
            self.kernel_size = K
            self.stride = tuple(int(s) for s in stride)
            self.padding = 1
        else:
            # TODO(synk): only mode='nearest' is implemented; linear/bilinear/
            # trilinear/area interpolation are not translated.
            assert mode == 'nearest'
            self.mode = mode

    def __call__(self, encoder_features, x):
        output_size = encoder_features.shape[2:]
        if self.transposed_conv:
            return convtranspose3d_pallas(x, self.weight, self.bias,
                                          output_size, self.stride,
                                          self.padding, self.kernel_size)
        return nearest_interp3d_pallas(x, output_size)


# ----------------------------------------------------------------------------
# Pure-JAX references for validation
# ----------------------------------------------------------------------------
def _nearest_ref(x, size):
    N, C, Di, Hi, Wi = x.shape
    Do, Ho, Wo = size
    di = (jnp.arange(Do) * Di) // Do
    hi = (jnp.arange(Ho) * Hi) // Ho
    wi = (jnp.arange(Wo) * Wi) // Wo
    return x[:, :, di][:, :, :, hi][:, :, :, :, wi]


def _convt_ref(x, weight, bias, size, stride, padding=1, K=3):
    N, Ci, Di, Hi, Wi = x.shape
    outpad = [o - ((i - 1) * s - 2 * padding + K)
              for o, i, s in zip(size, (Di, Hi, Wi), stride)]
    rhs = jnp.transpose(weight[:, :, ::-1, ::-1, ::-1], (1, 0, 2, 3, 4))
    pad = [(K - 1 - padding, K - 1 - padding + op) for op in outpad]
    y = lax.conv_general_dilated(x, rhs, window_strides=(1, 1, 1), padding=pad,
                                 lhs_dilation=stride,
                                 dimension_numbers=('NCDHW', 'OIDHW', 'NCDHW'))
    return y + bias[None, :, None, None, None]


if __name__ == "__main__":
    key = jax.random.PRNGKey(0)
    k1, k2, k3, k4 = jax.random.split(key, 4)

    # small shapes: N=2, C_in=4, (D,H,W)=(4,8,8); encoder gives target (4,16,16)
    x = jax.random.normal(k1, (2, 4, 4, 8, 8), jnp.float32)
    encoder_features = jax.random.normal(k2, (2, 6, 4, 16, 16), jnp.float32)

    # interpolation branch (transposed_conv=False, mode='nearest')
    up_interp = Upsampling(transposed_conv=False, mode='nearest')
    y_interp = jax.block_until_ready(up_interp(encoder_features, x))
    assert y_interp.shape == (2, 4, 4, 16, 16)
    assert jnp.allclose(y_interp, _nearest_ref(x, (4, 16, 16)), atol=1e-5)

    # nearest with a depth change (exercises the depth-gather path)
    x_small_d = jax.random.normal(k4, (2, 4, 2, 8, 8), jnp.float32)
    y2 = jax.block_until_ready(nearest_interp3d_pallas(x_small_d, (4, 16, 16)))
    assert jnp.allclose(y2, _nearest_ref(x_small_d, (4, 16, 16)), atol=1e-5)

    # transposed-conv branch (ConvTranspose3d k=3, stride=(1,2,2), pad=1)
    up_tc = Upsampling(transposed_conv=True, in_channels=4, out_channels=6,
                       kernel_size=3, scale_factor=(1, 2, 2), key=k3)
    y_tc = jax.block_until_ready(up_tc(encoder_features, x))
    assert y_tc.shape == (2, 6, 4, 16, 16)
    ref_tc = _convt_ref(x, up_tc.weight, up_tc.bias, (4, 16, 16),
                        stride=(1, 2, 2))
    assert jnp.allclose(y_tc, ref_tc, atol=1e-4)

    # transposed-conv with stride (2,2,2) (exercises the depth phases)
    enc2 = jax.random.normal(k2, (2, 6, 8, 16, 16), jnp.float32)
    up_tc2 = Upsampling(transposed_conv=True, in_channels=4, out_channels=6,
                        kernel_size=3, scale_factor=(2, 2, 2), key=k3)
    y_tc2 = jax.block_until_ready(up_tc2(enc2, x))
    assert y_tc2.shape == (2, 6, 8, 16, 16)
    ref_tc2 = _convt_ref(x, up_tc2.weight, up_tc2.bias, (8, 16, 16),
                         stride=(2, 2, 2))
    assert jnp.allclose(y_tc2, ref_tc2, atol=1e-4)

    print("KERNEL_OK")
</pallas_src>

<mosaic_0001>
module attributes {stable_mosaic.version = 11 : i64} {
  func.func @_nearest_kernel(%arg0: i32, %arg1: memref<32x64xf32, #tpu.memory_space<vmem>>, %arg2: memref<64x256xf32, #tpu.memory_space<vmem>>, %arg3: memref<32x256xf32, #tpu.memory_space<vmem>>) attributes {dimension_semantics = [#tpu.dimension_semantics<parallel>], iteration_bounds = array<i64: 1>, scalar_prefetch = 0 : i64, scratch_operands = 0 : i64, tpu.core_type = #tpu.core_type<tc>, window_params = [{transform_indices = @transform_0, window_bounds = array<i64: 32, 64>}, {pipeline_mode = #tpu.pipeline_mode<synchronous>, transform_indices = @transform_1, window_bounds = array<i64: 64, 256>}, {transform_indices = @transform_2, window_bounds = array<i64: 32, 256>}]} {
    %c0 = arith.constant 0 : index
    %c0_0 = arith.constant 0 : index
    %0 = vector.load %arg1[%c0, %c0_0] : memref<32x64xf32, #tpu.memory_space<vmem>>, vector<32x64xf32>
    %c0_1 = arith.constant 0 : index
    %c0_2 = arith.constant 0 : index
    %1 = vector.load %arg2[%c0_1, %c0_2] : memref<64x256xf32, #tpu.memory_space<vmem>>, vector<64x256xf32>
    %cst = arith.constant dense<0.000000e+00> : vector<32x256xf32>
    %2 = tpu.matmul %0, %1, %cst {dimension_numbers = #tpu.dot_dimension_numbers<[1], [0], [0], [1], [0, 0, 1, 1], [], []>} : vector<32x64xf32>, vector<64x256xf32>, vector<32x256xf32> -> vector<32x256xf32>
    %c0_3 = arith.constant 0 : index
    %c0_4 = arith.constant 0 : index
    %3 = vector.load %arg3[%c0_3, %c0_4] : memref<32x256xf32, #tpu.memory_space<vmem>>, vector<32x256xf32>
    tpu.vector_store %arg3[%c0_3, %c0_4], %2 {strides = array<i32>} : memref<32x256xf32, #tpu.memory_space<vmem>>, vector<32x256xf32>,
    return
  }
  func.func @transform_0(%arg0: i32) -> (i32, i32) {
    %c0_i32 = arith.constant 0 : i32
    %c0_i32_0 = arith.constant 0 : i32
    return %arg0, %c0_i32 : i32, i32
  }
  func.func @transform_1(%arg0: i32) -> (i32, i32) {
    %c0_i32 = arith.constant 0 : i32
    %c0_i32_0 = arith.constant 0 : i32
    %c0_i32_1 = arith.constant 0 : i32
    return %c0_i32, %c0_i32_0 : i32, i32
  }
  func.func @transform_2(%arg0: i32) -> (i32, i32) {
    %c0_i32 = arith.constant 0 : i32
    %c0_i32_0 = arith.constant 0 : i32
    return %arg0, %c0_i32 : i32, i32
  }
}

</mosaic_0001>

<llo_original>
// kernel: tpu_custom_call.1
$region0: #{tpu_custom_call.1}
  #allocation0 [shape = 'u32[]', space=smem, size = 0x4, offset = 0x4, fixed_abs, tag = 'smem constant byte address 0x4 - core index']
  #allocation1 [shape = 'u32[144,128]{1,0:T(1,128)}', space=vmem, size = 0x12000, scoped, tag = 'internal scratch']
  %s0 = inlined_call_operand.hbm [shape: f32[32,64], index: 0, kind: input, shape index: {}]
  %s1 = inlined_call_operand.hbm [shape: f32[64,256], index: 1, kind: input, shape index: {}]
  %s2 = inlined_call_operand.hbm [shape: f32[32,256], index: 2, kind: output, shape index: {}]
  %s3 = sld [smem:[#allocation0]]
  $region26: #{tpu_custom_call.1} parent=0
    _
  %s5 = ssub.s32 1, %s3
  %s6 = scalar_select 0, %s5, %s3
  $region1: #{tpu_custom_call.1} parent=0
    #allocation2 [shape = 'u8[16384]{0}', space=vmem, size = 0x4000, scoped, tag = 'input window, operand 0, single buffered']
    #allocation3 [shape = 's32[1]{0}', space=sflag, size = 0x4, scoped, tag = 'scoped memory for tpu_custom_call.1']
    #allocation4 [shape = 's32[1]{0}', space=sflag, size = 0x4, scoped, tag = 'scoped memory for tpu_custom_call.1']
    #allocation5 [shape = 'u8[65536]{0}', space=vmem, size = 0x10000, scoped, tag = 'input window, operand 1, single buffered']
    #allocation6 [shape = 's32[1]{0}', space=sflag, size = 0x4, scoped, tag = 'scoped memory for tpu_custom_call.1']
    #allocation7 [shape = 'u8[32768]{0}', space=vmem, size = 0x8000, scoped, tag = 'output window, operand 0, single buffered']
    %7 = vsyncpa [#allocation3], 0
    %8 = vsyncpa [#allocation6], 0
    %9 = vsyncpa [#allocation4], 0
    // Predicated region
    $region2: #{tpu_custom_call.1} parent=1 // pred_check
      _
    $region3: #{tpu_custom_call.1} parent=1 // pred_check_branch
      %11 = sbr.rel (0) target = $region5
    $region4: #{tpu_custom_call.1} parent=1 // pred_region
      %s13 = ssub.s32 512, 512
      %14 = vsyncadd [#allocation3], %s13
      %s15 = sshll.u32 [#allocation2], 4
      %s16 = int_to_ptr.vmem [resolvable:$true] %s15
      %21 = dma.hbm_to_vmem [thread:$0]  %s0, 512, %s16, [#allocation3], 128, 128, 8
    $region5: #{tpu_custom_call.1} parent=1 // pred_fallthru
      _
    // Predicated region
    $region6: #{tpu_custom_call.1} parent=1 // pred_check
      _
    $region7: #{tpu_custom_call.1} parent=1 // pred_check_branch
      %23 = sbr.rel (0) target = $region9
    $region8: #{tpu_custom_call.1} parent=1 // pred_region
      %s25 = ssub.s32 2048, 2048
      %26 = vsyncadd [#allocation6], %s25
      %s27 = sshll.u32 [#allocation5], 4
      %s28 = int_to_ptr.vmem [resolvable:$true] %s27
      %33 = dma.hbm_to_vmem [thread:$0]  %s1, 2048, %s28, [#allocation6], 256, 256, 16
    $region9: #{tpu_custom_call.1} parent=1 // pred_fallthru
      _
    // Predicated region
    $region10: #{tpu_custom_call.1} parent=1 // pred_check
      _
    $region11: #{tpu_custom_call.1} parent=1 // pred_check_branch
      %35 = sbr.rel (0) target = $region13
    $region12: #{tpu_custom_call.1} parent=1 // pred_region
      %36 = dma.done [#allocation3], 512
    $region13: #{tpu_custom_call.1} parent=1 // pred_fallthru
      _
    // Predicated region
    $region14: #{tpu_custom_call.1} parent=1 // pred_check
      _
    $region15: #{tpu_custom_call.1} parent=1 // pred_check_branch
      %38 = sbr.rel (0) target = $region17
    $region16: #{tpu_custom_call.1} parent=1 // pred_region
      %39 = dma.done [#allocation6], 2048
    $region17: #{tpu_custom_call.1} parent=1 // pred_fallthru
      _
    %v40 = vld [vmem:[#allocation2] sm:$0xff]
    %v41 = vld [vmem:[#allocation2 + $0x8] sm:$0xff]
    %v42 = vld [vmem:[#allocation2 + $0x10] sm:$0xff]
    %v43 = vld [vmem:[#allocation2 + $0x18] sm:$0xff]
    %v44 = vld [vmem:[#allocation5] sm:$0xff]
    %v45 = vld [vmem:[#allocation5 + $0x8] sm:$0xff]
    %v46 = vld [vmem:[#allocation5 + $0x10] sm:$0xff]
    %v47 = vld [vmem:[#allocation5 + $0x18] sm:$0xff]
    %v48 = vld [vmem:[#allocation5 + $0x20] sm:$0xff]
    %v49 = vld [vmem:[#allocation5 + $0x28] sm:$0xff]
    %v50 = vld [vmem:[#allocation5 + $0x30] sm:$0xff]
    %v51 = vld [vmem:[#allocation5 + $0x38] sm:$0xff]
    %v52 = vld [vmem:[#allocation5 + $0x40] sm:$0xff]
    %v53 = vld [vmem:[#allocation5 + $0x48] sm:$0xff]
    %v54 = vld [vmem:[#allocation5 + $0x50] sm:$0xff]
    %v55 = vld [vmem:[#allocation5 + $0x58] sm:$0xff]
    %v56 = vld [vmem:[#allocation5 + $0x60] sm:$0xff]
    %v57 = vld [vmem:[#allocation5 + $0x68] sm:$0xff]
    %v58 = vld [vmem:[#allocation5 + $0x70] sm:$0xff]
    %v59 = vld [vmem:[#allocation5 + $0x78] sm:$0xff]
    %vm60 = vcmask 523264
    %v62 = vsel %vm60, %v40, 0
    %v65 = vsel %vm60, %v41, 0
    %v68 = vsel %vm60, %v42, 0
    %v71 = vsel %vm60, %v43, 0
    %73 = vmatprep.subr.mxu0 0.0
    %74 = vmatpush1.msra.mxu0 0.0
    %75 = vmatprep.subr.mxu0 0.0
    %76 = vmatpush1.msra.mxu0 0.0
    %77 = vmatprep.subr.mxu0 0.0
    %78 = vmatpush1.msra.mxu0 0.0
    %79 = vmatprep.subr.mxu0 0.0
    %80 = vmatpush1.msra.mxu0 0.0
    %81 = vmatprep.subr.mxu0 0.0
    %82 = vmatpush1.msra.mxu0 0.0
    %83 = vmatprep.subr.mxu0 0.0
    %84 = vmatpush1.msra.mxu0 0.0
    %85 = vmatprep.subr.mxu0 0.0
    %86 = vmatpush1.msra.mxu0 0.0
    %87 = vmatprep.subr.mxu0 0.0
    %88 = vmatpush1.msra.mxu0 0.0
    %89 = vmatprep.subr.mxu0 %v59
    %90 = vmatpush1.msra.mxu0 %v58
    %91 = vmatprep.subr.mxu0 %v57
    %92 = vmatpush1.msra.mxu0 %v56
    %93 = vmatprep.subr.mxu0 %v55
    %94 = vmatpush1.msra.mxu0 %v54
    %95 = vmatprep.subr.mxu0 %v53
    %96 = vmatpush1.msra.mxu0 %v52
    %97 = vmatprep.subr.mxu0 %v51
    %98 = vmatpush1.msra.mxu0 %v50
    %99 = vmatprep.subr.mxu0 %v49
    %100 = vmatpush1.msra.mxu0 %v48
    %101 = vmatprep.subr.mxu0 %v47
    %102 = vmatpush1.msra.mxu0 %v46
    %103 = vmatprep.subr.mxu0 %v45
    %104 = vmatpush1.msra.mxu0 %v44
    %105 = vmatprep.subr.mxu0 0.0
    %106 = vmatpush2.msra.mxu0 0.0
    %107 = vmatprep.subr.mxu0 0.0
    %108 = vmatpush2.msra.mxu0 0.0
    %109 = vmatprep.subr.mxu0 0.0
    %110 = vmatpush2.msra.mxu0 0.0
    %111 = vmatprep.subr.mxu0 0.0
    %112 = vmatpush2.msra.mxu0 0.0
    %113 = vmatprep.subr.mxu0 0.0
    %114 = vmatpush2.msra.mxu0 0.0
    %115 = vmatprep.subr.mxu0 0.0
    %116 = vmatpush2.msra.mxu0 0.0
    %117 = vmatprep.subr.mxu0 0.0
    %118 = vmatpush2.msra.mxu0 0.0
    %119 = vmatprep.subr.mxu0 0.0
    %120 = vmatpush2.msra.mxu0 0.0
    %121 = vmatprep.subr.mxu0 0.0
    %122 = vmatpush2.msra.mxu0 0.0
    %123 = vmatprep.subr.mxu0 0.0
    %124 = vmatpush2.msra.mxu0 0.0
    %125 = vmatprep.subr.mxu0 0.0
    %126 = vmatpush2.msra.mxu0 0.0
    %127 = vmatprep.subr.mxu0 0.0
    %128 = vmatpush2.msra.mxu0 0.0
    %129 = vmatprep.subr.mxu0 0.0
    %130 = vmatpush2.msra.mxu0 0.0
    %131 = vmatprep.subr.mxu0 0.0
    %132 = vmatpush2.msra.mxu0 0.0
    %133 = vmatprep.subr.mxu0 0.0
    %134 = vmatpush2.msra.mxu0 0.0
    %135 = vmatprep.subr.mxu0 0.0
    %136 = vmatpush2.msra.mxu0 0.0
    %137 = vmatprep.mubr.f32.mxu0 0.0
    %138 = vmatmul.mubr.f32.gmra.mxu0 %v62
    %v139 = vpop.f32.mrf.mxu0
    %v140 = vadd.f32 0.0, %v139
    %v141 = vpop.f32.mrf.mxu0
    %v142 = vadd.f32 0.0, %v141
    %143 = vmatprep.mubr.f32.mxu0 0.0
    %144 = vmatmul.mubr.f32.gmra.mxu0 %v65
    %v145 = vpop.f32.mrf.mxu0
    %v146 = vadd.f32 0.0, %v145
    %v147 = vpop.f32.mrf.mxu0
    %v148 = vadd.f32 0.0, %v147
    %149 = vmatprep.mubr.f32.mxu0 0.0
    %150 = vmatmul.mubr.f32.gmra.mxu0 %v68
    %v151 = vpop.f32.mrf.mxu0
    %v152 = vadd.f32 0.0, %v151
    %v153 = vpop.f32.mrf.mxu0
    %v154 = vadd.f32 0.0, %v153
    %155 = vmatprep.mubr.f32.mxu0 0.0
    %156 = vmatmul.mubr.f32.gmra.mxu0 %v71
    %v157 = vpop.f32.mrf.mxu0
    %v158 = vadd.f32 0.0, %v157
    %v159 = vpop.f32.mrf.mxu0
    %v160 = vadd.f32 0.0, %v159
    %161 = vdwg.mxu0
    %162 = vst [vmem:[#allocation7] sm:$0xff] %v140
    %163 = vst [vmem:[#allocation7 + $0x8] sm:$0xff] %v142
    %164 = vst [vmem:[#allocation7 + $0x10] sm:$0xff] %v146
    %165 = vst [vmem:[#allocation7 + $0x18] sm:$0xff] %v148
    %166 = vst [vmem:[#allocation7 + $0x20] sm:$0xff] %v152
    %167 = vst [vmem:[#allocation7 + $0x28] sm:$0xff] %v154
    %168 = vst [vmem:[#allocation7 + $0x30] sm:$0xff] %v158
    %169 = vst [vmem:[#allocation7 + $0x38] sm:$0xff] %v160
    // Predicated region
    $region18: #{tpu_custom_call.1} parent=1 // pred_check
      _
    $region19: #{tpu_custom_call.1} parent=1 // pred_check_branch
      %171 = sbr.rel (0) target = $region21
    $region20: #{tpu_custom_call.1} parent=1 // pred_region
      %s173 = ssub.s32 1024, 1024
      %174 = vsyncadd [#allocation4], %s173
      %s175 = sshll.u32 [#allocation7], 4
      %s176 = int_to_ptr.vmem [resolvable:$true] %s175
      %181 = dma.vmem_to_hbm [thread:$0]  %s176, 1024, %s2, [#allocation4], 256, 256, 16
    $region21: #{tpu_custom_call.1} parent=1 // pred_fallthru
      _
    // Predicated region
    $region22: #{tpu_custom_call.1} parent=1 // pred_check
      _
    $region23: #{tpu_custom_call.1} parent=1 // pred_check_branch
      %183 = sbr.rel (0) target = $region25
    $region24: #{tpu_custom_call.1} parent=1 // pred_region
      %184 = dma.done [#allocation4], 1024
    $region25: #{tpu_custom_call.1} parent=1 // pred_fallthru
      _
    %185 = vsyncpa [#allocation3], 1
    %186 = vsyncpa [#allocation6], 1
    %187 = vsyncpa [#allocation4], 1

</llo_original>
